<compile_context>
chip_gen: v5e
topology: v5e:2x2
jax: 0.10.0
libtpu: 0.0.40
codegen_flags: <defaults>
</compile_context>

<pallas_src>
import jax
import jax.numpy as jnp
from jax.experimental import pallas as pl
from jax.experimental.pallas import tpu as pltpu


def _sage_layer(a_bf, h, w_stack_bf, b):
    """One SAGEConv(normalize=True) + tanh.

    a_bf:       (N, N)   bf16 row-normalized mean-aggregation adjacency
    h:          (N, F)   f32 layer input
    w_stack_bf: (2F, H)  bf16 stacked [lin_l.weight.T ; lin_r.weight.T]
    b:          (1, H)   f32 bias (lin_l bias)
    """
    h_bf = h.astype(jnp.bfloat16)
    # mean_{j in N(i)} h_j  -- MXU, f32 accumulation.
    aggr = jnp.dot(a_bf, h_bf, preferred_element_type=jnp.float32)
    # Fused lin_l(aggr) + lin_r(h): single (N, 2F) @ (2F, H) MXU dot.
    cat = jnp.concatenate([aggr.astype(jnp.bfloat16), h_bf], axis=-1)
    out = jnp.dot(cat, w_stack_bf, preferred_element_type=jnp.float32) + b
    # normalize=True -> F.normalize(out, p=2, dim=-1, eps=1e-12).
    # out / max(sqrt(ss), 1e-12) == out * rsqrt(max(ss, 1e-24))  (sqrt monotone);
    # rsqrt runs on the otherwise-idle EUP slot, no VPU divide.
    ss = jnp.sum(out * out, axis=-1, keepdims=True)
    out = out * jax.lax.rsqrt(jnp.maximum(ss, 1e-24))
    return jnp.tanh(out)


def _mean_adjacency(edge_index, num_nodes, dtype=jnp.float32):
    """Dense row-normalized mean-aggregation matrix: A[i, j] = 1/deg(i) per edge j->i."""
    src = edge_index[0]
    dst = edge_index[1]
    a = jnp.zeros((num_nodes, num_nodes), jnp.float32).at[dst, src].add(1.0)
    deg = jnp.sum(a, axis=1, keepdims=True)
    # Nodes with no in-edges aggregate to 0 (matches PyG). Normalize in f32, then cast.
    return (a / jnp.maximum(deg, 1.0)).astype(dtype)


def _full_spec(shape):
    return pl.BlockSpec(shape, lambda i, _n=len(shape): (0,) * _n)


def extractor_forward(x, edge_index_connections, edge_index_destinations, params):
    """Pallas equivalent of Extractor.forward (3x SAGEConv(normalize=True) + tanh)."""
    n, f_in = x.shape
    hidden = params["w_l1"].shape[0]

    # TODO(synk): cache the dense adjacencies across calls when edge_index is static;
    # the O(N^2) scatter-add can cost more than the fused kernel itself at large N.
    a_conn = _mean_adjacency(edge_index_connections, n, jnp.bfloat16)
    a_dest = _mean_adjacency(edge_index_destinations, n, jnp.bfloat16)

    # Pack the 6 weight matrices into one contiguous bf16 slab (pre-transposed and
    # stacked per layer so each layer is one fused dot) and the 3 biases into one
    # f32 slab: cuts 12 separate input DMAs down to 5.
    w_slab = jnp.concatenate(
        [params["w_l1"].T, params["w_r1"].T,      # (f_in, H) each
         params["w_l2"].T, params["w_r2"].T,      # (H, H) each
         params["w_l3"].T, params["w_r3"].T],     # (H, H) each
        axis=0).astype(jnp.bfloat16)              # (2*f_in + 4*H, H)
    b_slab = jnp.stack(
        [params["b1"], params["b2"], params["b3"]], axis=0).astype(jnp.float32)  # (3, H)

    s1 = 2 * f_in                 # end of layer-1 stacked weight (16: bf16-sublane aligned)
    s2 = s1 + 2 * hidden          # end of layer-2 stacked weight (80: aligned)
    s3 = s2 + 2 * hidden

    def kernel(a_conn_ref, a_dest_ref, x_ref, w_ref, b_ref, o_ref):
        a_conn_v = a_conn_ref[...]
        a_dest_v = a_dest_ref[...]
        w = w_ref[...]
        b = b_ref[...]
        h1 = _sage_layer(a_conn_v, x_ref[...].astype(jnp.float32), w[0:s1], b[0:1])
        h2 = _sage_layer(a_dest_v, h1, w[s1:s2], b[1:2])
        h3 = _sage_layer(a_conn_v, h2, w[s2:s3], b[2:3])
        o_ref[...] = h3.astype(o_ref.dtype)

    inputs = (a_conn, a_dest, x.astype(jnp.float32), w_slab, b_slab)

    # Advisory cost estimate for XLA's scheduler.
    flops = 0
    for fi in (f_in, hidden, hidden):
        flops += 2 * n * n * fi                 # A @ h
        flops += 2 * n * (2 * fi) * hidden      # fused [aggr||h] @ [Wl;Wr]
    bytes_accessed = sum(int(a.size) * a.dtype.itemsize for a in inputs) + n * hidden * 4
    transcendentals = 3 * n * hidden + 3 * n    # tanh + rsqrt

    # Explicit VMEM budget: above v5e's 16 MiB default scoped limit, below v7x's
    # 64 MiB physical VMEM (leave headroom).
    vmem_needed = (2 * 2 * int(a_conn.size) * 2                     # two bf16 A's, double-buffered
                   + 2 * (int(x.size) * 4 + int(w_slab.size) * 2
                          + int(b_slab.size) * 4 + n * hidden * 4)  # small operands + output
                   + (4 << 20))                                     # intermediates headroom
    vmem_limit = int(min(max(vmem_needed, 32 << 20), 48 << 20))

    return pl.pallas_call(
        kernel,
        out_shape=jax.ShapeDtypeStruct((n, hidden), jnp.float32),
        grid_spec=pltpu.PrefetchScalarGridSpec(
            num_scalar_prefetch=0,
            grid=(1,),
            in_specs=[_full_spec(a.shape) for a in inputs],
            out_specs=_full_spec((n, hidden)),
        ),
        compiler_params=pltpu.CompilerParams(
            dimension_semantics=("arbitrary",),
            vmem_limit_bytes=vmem_limit,
        ),
        cost_estimate=pl.CostEstimate(
            flops=flops,
            transcendentals=transcendentals,
            bytes_accessed=bytes_accessed,
        ),
    )(*inputs)


if __name__ == "__main__":
    hidden_neurons = 32
    num_nodes = 8
    in_features = 8          # Extractor.conv1 = SAGEConv(8, hidden_neurons)
    num_edges = 16

    key = jax.random.PRNGKey(0)
    keys = jax.random.split(key, 12)

    def lin_init(kw, kb, out_f, in_f, with_bias=True):
        bound = 1.0 / (in_f ** 0.5)
        w = jax.random.uniform(kw, (out_f, in_f), jnp.float32, -bound, bound)
        b = (jax.random.uniform(kb, (out_f,), jnp.float32, -bound, bound)
             if with_bias else None)
        return w, b

    # SAGEConv params: lin_l (with bias) applied to aggregated neighbors,
    # lin_r (no bias) applied to the root node features.
    w_l1, b1 = lin_init(keys[0], keys[1], hidden_neurons, in_features)
    w_r1, _ = lin_init(keys[2], keys[2], hidden_neurons, in_features, with_bias=False)
    w_l2, b2 = lin_init(keys[3], keys[4], hidden_neurons, hidden_neurons)
    w_r2, _ = lin_init(keys[5], keys[5], hidden_neurons, hidden_neurons, with_bias=False)
    w_l3, b3 = lin_init(keys[6], keys[7], hidden_neurons, hidden_neurons)
    w_r3, _ = lin_init(keys[8], keys[8], hidden_neurons, hidden_neurons, with_bias=False)

    params = dict(w_l1=w_l1, w_r1=w_r1, b1=b1,
                  w_l2=w_l2, w_r2=w_r2, b2=b2,
                  w_l3=w_l3, w_r3=w_r3, b3=b3)

    x = jax.random.normal(keys[9], (num_nodes, in_features), jnp.float32)
    edge_index_connections = jax.random.randint(keys[10], (2, num_edges), 0, num_nodes)
    edge_index_destinations = jax.random.randint(keys[11], (2, num_edges), 0, num_nodes)

    out = extractor_forward(x, edge_index_connections, edge_index_destinations, params)
    out = jax.block_until_ready(out)

    # Pure-JAX f32 reference of the same SAGEConv(normalize=True)+tanh math.
    def ref_forward(x, ei_c, ei_d, p):
        a_c = _mean_adjacency(ei_c, x.shape[0], jnp.float32)
        a_d = _mean_adjacency(ei_d, x.shape[0], jnp.float32)
        h = x
        for a, wl, wr, b in ((a_c, p["w_l1"], p["w_r1"], p["b1"]),
                             (a_d, p["w_l2"], p["w_r2"], p["b2"]),
                             (a_c, p["w_l3"], p["w_r3"], p["b3"])):
            o = (a @ h) @ wl.T + h @ wr.T + b
            norm = jnp.sqrt(jnp.sum(o * o, axis=-1, keepdims=True))
            o = o / jnp.maximum(norm, 1e-12)
            h = jnp.tanh(o)
        return h

    ref = ref_forward(x, edge_index_connections, edge_index_destinations, params)
    err = float(jnp.max(jnp.abs(out - ref)))
    assert out.shape == (num_nodes, hidden_neurons)
    # bf16 dot operands (f32 accumulation) -> relaxed tolerance vs. the f32 reference.
    assert err < 2e-2, f"max abs err {err}"

    print("KERNEL_OK")
</pallas_src>

<mosaic_0001>
module attributes {stable_mosaic.version = 11 : i64} {
  func.func @kernel(%arg0: i32, %arg1: memref<8x8xbf16, #tpu.memory_space<vmem>>, %arg2: memref<8x8xbf16, #tpu.memory_space<vmem>>, %arg3: memref<8x8xf32, #tpu.memory_space<vmem>>, %arg4: memref<144x32xbf16, #tpu.memory_space<vmem>>, %arg5: memref<3x32xf32, #tpu.memory_space<vmem>>, %arg6: memref<8x32xf32, #tpu.memory_space<vmem>>) attributes {dimension_semantics = [#tpu.dimension_semantics<arbitrary>], iteration_bounds = array<i64: 1>, scalar_prefetch = 0 : i64, scratch_operands = 0 : i64, tpu.core_type = #tpu.core_type<tc>, window_params = [{pipeline_mode = #tpu.pipeline_mode<synchronous>, transform_indices = @transform_0, window_bounds = array<i64: 8, 8>}, {pipeline_mode = #tpu.pipeline_mode<synchronous>, transform_indices = @transform_1, window_bounds = array<i64: 8, 8>}, {pipeline_mode = #tpu.pipeline_mode<synchronous>, transform_indices = @transform_2, window_bounds = array<i64: 8, 8>}, {pipeline_mode = #tpu.pipeline_mode<synchronous>, transform_indices = @transform_3, window_bounds = array<i64: 144, 32>}, {pipeline_mode = #tpu.pipeline_mode<synchronous>, transform_indices = @transform_4, window_bounds = array<i64: 3, 32>}, {pipeline_mode = #tpu.pipeline_mode<synchronous>, transform_indices = @transform_5, window_bounds = array<i64: 8, 32>}]} {
    %c0 = arith.constant 0 : index
    %c0_0 = arith.constant 0 : index
    %0 = vector.load %arg1[%c0, %c0_0] : memref<8x8xbf16, #tpu.memory_space<vmem>>, vector<8x8xbf16>
    %c0_1 = arith.constant 0 : index
    %c0_2 = arith.constant 0 : index
    %1 = vector.load %arg2[%c0_1, %c0_2] : memref<8x8xbf16, #tpu.memory_space<vmem>>, vector<8x8xbf16>
    %c0_3 = arith.constant 0 : index
    %c0_4 = arith.constant 0 : index
    %2 = vector.load %arg4[%c0_3, %c0_4] : memref<144x32xbf16, #tpu.memory_space<vmem>>, vector<144x32xbf16>
    %c0_5 = arith.constant 0 : index
    %c0_6 = arith.constant 0 : index
    %3 = vector.load %arg5[%c0_5, %c0_6] : memref<3x32xf32, #tpu.memory_space<vmem>>, vector<3x32xf32>
    %c0_7 = arith.constant 0 : index
    %c0_8 = arith.constant 0 : index
    %4 = vector.load %arg3[%c0_7, %c0_8] : memref<8x8xf32, #tpu.memory_space<vmem>>, vector<8x8xf32>
    %5 = vector.extract_strided_slice %2 {offsets = [0, 0], sizes = [16, 32], strides = [1, 1]} : vector<144x32xbf16> to vector<16x32xbf16>
    %6 = vector.extract_strided_slice %3 {offsets = [0, 0], sizes = [1, 32], strides = [1, 1]} : vector<3x32xf32> to vector<1x32xf32>
    %7 = arith.truncf %4 : vector<8x8xf32> to vector<8x8xbf16>
    %cst = arith.constant dense<0.000000e+00> : vector<8x8xf32>
    %8 = tpu.matmul %0, %7, %cst {dimension_numbers = #tpu.dot_dimension_numbers<[1], [0], [0], [1], [0, 0, 1, 1], [], []>} : vector<8x8xbf16>, vector<8x8xbf16>, vector<8x8xf32> -> vector<8x8xf32>
    %9 = arith.truncf %8 : vector<8x8xf32> to vector<8x8xbf16>
    %10 = tpu.concatenate %9, %7 in 1 : vector<8x8xbf16>, vector<8x8xbf16> -> vector<8x16xbf16>
    %cst_9 = arith.constant dense<0.000000e+00> : vector<8x32xf32>
    %11 = tpu.matmul %10, %5, %cst_9 {dimension_numbers = #tpu.dot_dimension_numbers<[1], [0], [0], [1], [0, 0, 1, 1], [], []>} : vector<8x16xbf16>, vector<16x32xbf16>, vector<8x32xf32> -> vector<8x32xf32>
    %12 = vector.broadcast %6 : vector<1x32xf32> to vector<8x32xf32>
    %13 = arith.addf %11, %12 : vector<8x32xf32>
    %14 = arith.mulf %13, %13 : vector<8x32xf32>
    %cst_10 = arith.constant dense<0.000000e+00> : vector<8xf32>
    %15 = vector.multi_reduction <add>, %14, %cst_10 [1] : vector<8x32xf32> to vector<8xf32>
    %16 = vector.shape_cast %15 : vector<8xf32> to vector<8x1xf32>
    %cst_11 = arith.constant 1.000000e-24 : f32
    %17 = vector.broadcast %cst_11 : f32 to vector<8x1xf32>
    %18 = arith.maximumf %16, %17 : vector<8x1xf32>
    %19 = math.rsqrt %18 : vector<8x1xf32>
    %20 = vector.broadcast %19 : vector<8x1xf32> to vector<8x32xf32>
    %21 = arith.mulf %13, %20 : vector<8x32xf32>
    %22 = math.tanh %21 : vector<8x32xf32>
    %23 = vector.extract_strided_slice %2 {offsets = [16, 0], sizes = [64, 32], strides = [1, 1]} : vector<144x32xbf16> to vector<64x32xbf16>
    %24 = vector.extract_strided_slice %3 {offsets = [1, 0], sizes = [1, 32], strides = [1, 1]} : vector<3x32xf32> to vector<1x32xf32>
    %25 = arith.truncf %22 : vector<8x32xf32> to vector<8x32xbf16>
    %cst_12 = arith.constant dense<0.000000e+00> : vector<8x32xf32>
    %26 = tpu.matmul %1, %25, %cst_12 {dimension_numbers = #tpu.dot_dimension_numbers<[1], [0], [0], [1], [0, 0, 1, 1], [], []>} : vector<8x8xbf16>, vector<8x32xbf16>, vector<8x32xf32> -> vector<8x32xf32>
    %27 = arith.truncf %26 : vector<8x32xf32> to vector<8x32xbf16>
    %28 = tpu.concatenate %27, %25 in 1 : vector<8x32xbf16>, vector<8x32xbf16> -> vector<8x64xbf16>
    %cst_13 = arith.constant dense<0.000000e+00> : vector<8x32xf32>
    %29 = tpu.matmul %28, %23, %cst_13 {dimension_numbers = #tpu.dot_dimension_numbers<[1], [0], [0], [1], [0, 0, 1, 1], [], []>} : vector<8x64xbf16>, vector<64x32xbf16>, vector<8x32xf32> -> vector<8x32xf32>
    %30 = vector.broadcast %24 : vector<1x32xf32> to vector<8x32xf32>
    %31 = arith.addf %29, %30 : vector<8x32xf32>
    %32 = arith.mulf %31, %31 : vector<8x32xf32>
    %cst_14 = arith.constant dense<0.000000e+00> : vector<8xf32>
    %33 = vector.multi_reduction <add>, %32, %cst_14 [1] : vector<8x32xf32> to vector<8xf32>
    %34 = vector.shape_cast %33 : vector<8xf32> to vector<8x1xf32>
    %cst_15 = arith.constant 1.000000e-24 : f32
    %35 = vector.broadcast %cst_15 : f32 to vector<8x1xf32>
    %36 = arith.maximumf %34, %35 : vector<8x1xf32>
    %37 = math.rsqrt %36 : vector<8x1xf32>
    %38 = vector.broadcast %37 : vector<8x1xf32> to vector<8x32xf32>
    %39 = arith.mulf %31, %38 : vector<8x32xf32>
    %40 = math.tanh %39 : vector<8x32xf32>
    %41 = vector.extract_strided_slice %2 {offsets = [80, 0], sizes = [64, 32], strides = [1, 1]} : vector<144x32xbf16> to vector<64x32xbf16>
    %42 = vector.extract_strided_slice %3 {offsets = [2, 0], sizes = [1, 32], strides = [1, 1]} : vector<3x32xf32> to vector<1x32xf32>
    %43 = arith.truncf %40 : vector<8x32xf32> to vector<8x32xbf16>
    %cst_16 = arith.constant dense<0.000000e+00> : vector<8x32xf32>
    %44 = tpu.matmul %0, %43, %cst_16 {dimension_numbers = #tpu.dot_dimension_numbers<[1], [0], [0], [1], [0, 0, 1, 1], [], []>} : vector<8x8xbf16>, vector<8x32xbf16>, vector<8x32xf32> -> vector<8x32xf32>
    %45 = arith.truncf %44 : vector<8x32xf32> to vector<8x32xbf16>
    %46 = tpu.concatenate %45, %43 in 1 : vector<8x32xbf16>, vector<8x32xbf16> -> vector<8x64xbf16>
    %cst_17 = arith.constant dense<0.000000e+00> : vector<8x32xf32>
    %47 = tpu.matmul %46, %41, %cst_17 {dimension_numbers = #tpu.dot_dimension_numbers<[1], [0], [0], [1], [0, 0, 1, 1], [], []>} : vector<8x64xbf16>, vector<64x32xbf16>, vector<8x32xf32> -> vector<8x32xf32>
    %48 = vector.broadcast %42 : vector<1x32xf32> to vector<8x32xf32>
    %49 = arith.addf %47, %48 : vector<8x32xf32>
    %50 = arith.mulf %49, %49 : vector<8x32xf32>
    %cst_18 = arith.constant dense<0.000000e+00> : vector<8xf32>
    %51 = vector.multi_reduction <add>, %50, %cst_18 [1] : vector<8x32xf32> to vector<8xf32>
    %52 = vector.shape_cast %51 : vector<8xf32> to vector<8x1xf32>
    %cst_19 = arith.constant 1.000000e-24 : f32
    %53 = vector.broadcast %cst_19 : f32 to vector<8x1xf32>
    %54 = arith.maximumf %52, %53 : vector<8x1xf32>
    %55 = math.rsqrt %54 : vector<8x1xf32>
    %56 = vector.broadcast %55 : vector<8x1xf32> to vector<8x32xf32>
    %57 = arith.mulf %49, %56 : vector<8x32xf32>
    %58 = math.tanh %57 : vector<8x32xf32>
    %c0_20 = arith.constant 0 : index
    %c0_21 = arith.constant 0 : index
    %59 = vector.load %arg6[%c0_20, %c0_21] : memref<8x32xf32, #tpu.memory_space<vmem>>, vector<8x32xf32>
    tpu.vector_store %arg6[%c0_20, %c0_21], %58 {strides = array<i32>} : memref<8x32xf32, #tpu.memory_space<vmem>>, vector<8x32xf32>,
    return
  }
  func.func @transform_0(%arg0: i32) -> (i32, i32) {
    %c0_i32 = arith.constant 0 : i32
    %c0_i32_0 = arith.constant 0 : i32
    %c0_i32_1 = arith.constant 0 : i32
    return %c0_i32, %c0_i32_0 : i32, i32
  }
  func.func @transform_1(%arg0: i32) -> (i32, i32) {
    %c0_i32 = arith.constant 0 : i32
    %c0_i32_0 = arith.constant 0 : i32
    %c0_i32_1 = arith.constant 0 : i32
    return %c0_i32, %c0_i32_0 : i32, i32
  }
  func.func @transform_2(%arg0: i32) -> (i32, i32) {
    %c0_i32 = arith.constant 0 : i32
    %c0_i32_0 = arith.constant 0 : i32
    %c0_i32_1 = arith.constant 0 : i32
    return %c0_i32, %c0_i32_0 : i32, i32
  }
  func.func @transform_3(%arg0: i32) -> (i32, i32) {
    %c0_i32 = arith.constant 0 : i32
    %c0_i32_0 = arith.constant 0 : i32
    %c0_i32_1 = arith.constant 0 : i32
    return %c0_i32, %c0_i32_0 : i32, i32
  }
  func.func @transform_4(%arg0: i32) -> (i32, i32) {
    %c0_i32 = arith.constant 0 : i32
    %c0_i32_0 = arith.constant 0 : i32
    %c0_i32_1 = arith.constant 0 : i32
    return %c0_i32, %c0_i32_0 : i32, i32
  }
  func.func @transform_5(%arg0: i32) -> (i32, i32) {
    %c0_i32 = arith.constant 0 : i32
    %c0_i32_0 = arith.constant 0 : i32
    %c0_i32_1 = arith.constant 0 : i32
    return %c0_i32, %c0_i32_0 : i32, i32
  }
}

</mosaic_0001>

<llo_original>
// kernel: tpu_custom_call.1
$region0: #{tpu_custom_call.1}
  #allocation0 [shape = 'u32[]', space=smem, size = 0x4, offset = 0x4, fixed_abs, tag = 'smem constant byte address 0x4 - core index']
  #allocation1 [shape = 'u32[72,128]{1,0:T(1,128)}', space=vmem, size = 0x9000, scoped, tag = 'internal scratch']
  %s0 = inlined_call_operand.vmem [shape: bf16[8,8], index: 0, kind: input, shape index: {}]
  %s1 = inlined_call_operand.vmem [shape: bf16[8,8], index: 1, kind: input, shape index: {}]
  %s2 = inlined_call_operand.vmem [shape: f32[8,8], index: 2, kind: input, shape index: {}]
  %s3 = inlined_call_operand.vmem [shape: bf16[144,32], index: 3, kind: input, shape index: {}]
  %s4 = inlined_call_operand.vmem [shape: f32[3,32], index: 4, kind: input, shape index: {}]
  %s5 = inlined_call_operand.hbm [shape: f32[8,32], index: 5, kind: output, shape index: {}]
  %s6 = sld [smem:[#allocation0]]
  $region30: #{tpu_custom_call.1} parent=0
    _
  %s8 = ssub.s32 1, %s6
  %s9 = scalar_select 0, %s8, %s6
  $region1: #{tpu_custom_call.1} parent=0
    #allocation2 [shape = 'u8[4096]{0}', space=vmem, size = 0x1000, scoped, tag = 'output window, operand 0, single buffered']
    #allocation3 [shape = 's32[1]{0}', space=sflag, size = 0x4, scoped, tag = 'scoped memory for tpu_custom_call.1']
    %10 = vsyncpa [#allocation3], 0
    // Predicated region
    $region2: #{tpu_custom_call.1} parent=1 // pred_check
      _
    $region3: #{tpu_custom_call.1} parent=1 // pred_check_branch
      %12 = sbr.rel (0) target = $region5
    $region4: #{tpu_custom_call.1} parent=1 // pred_region
      _
    $region5: #{tpu_custom_call.1} parent=1 // pred_fallthru
      _
    // Predicated region
    $region6: #{tpu_custom_call.1} parent=1 // pred_check
      _
    $region7: #{tpu_custom_call.1} parent=1 // pred_check_branch
      %14 = sbr.rel (0) target = $region9
    $region8: #{tpu_custom_call.1} parent=1 // pred_region
      _
    $region9: #{tpu_custom_call.1} parent=1 // pred_fallthru
      _
    // Predicated region
    $region10: #{tpu_custom_call.1} parent=1 // pred_check
      _
    $region11: #{tpu_custom_call.1} parent=1 // pred_check_branch
      %16 = sbr.rel (0) target = $region13
    $region12: #{tpu_custom_call.1} parent=1 // pred_region
      _
    $region13: #{tpu_custom_call.1} parent=1 // pred_fallthru
      _
    // Predicated region
    $region14: #{tpu_custom_call.1} parent=1 // pred_check
      _
    $region15: #{tpu_custom_call.1} parent=1 // pred_check_branch
      %18 = sbr.rel (0) target = $region17
    $region16: #{tpu_custom_call.1} parent=1 // pred_region
      _
    $region17: #{tpu_custom_call.1} parent=1 // pred_fallthru
      _
    // Predicated region
    $region18: #{tpu_custom_call.1} parent=1 // pred_check
      _
    $region19: #{tpu_custom_call.1} parent=1 // pred_check_branch
      %20 = sbr.rel (0) target = $region21
    $region20: #{tpu_custom_call.1} parent=1 // pred_region
      _
    $region21: #{tpu_custom_call.1} parent=1 // pred_fallthru
      _
    %v22 = vld [vmem:[%s0] sm:$0xf]
    %v23 = vld [vmem:[%s1] sm:$0xf]
    %v24 = vld [vmem:[%s3] sm:$0xf]
    %v25 = vld [vmem:[%s3 + $0x4] sm:$0xf]
    %v26 = vld [vmem:[%s3 + $0x8] sm:$0xf]
    %v27 = vld [vmem:[%s3 + $0xc] sm:$0xf]
    %v28 = vld [vmem:[%s3 + $0x10] sm:$0xf]
    %v29 = vld [vmem:[%s3 + $0x14] sm:$0xf]
    %v30 = vld [vmem:[%s3 + $0x18] sm:$0xf]
    %v31 = vld [vmem:[%s3 + $0x1c] sm:$0xf]
    %v32 = vld [vmem:[%s3 + $0x20] sm:$0xf]
    %v33 = vld [vmem:[%s3 + $0x24] sm:$0xf]
    %v34 = vld [vmem:[%s3 + $0x28] sm:$0xf]
    %v35 = vld [vmem:[%s3 + $0x2c] sm:$0xf]
    %v36 = vld [vmem:[%s3 + $0x30] sm:$0xf]
    %v37 = vld [vmem:[%s3 + $0x34] sm:$0xf]
    %v38 = vld [vmem:[%s3 + $0x38] sm:$0xf]
    %v39 = vld [vmem:[%s3 + $0x3c] sm:$0xf]
    %v40 = vld [vmem:[%s3 + $0x40] sm:$0xf]
    %v41 = vld [vmem:[%s3 + $0x44] sm:$0xf]
    %v42 = vld [vmem:[%s4] sm:$0x7]
    %v43 = vld [vmem:[%s2] sm:$0xff]
    %v44 = vpack.c.bf16 %v43, %v43
    %vm45 = vcmask 64512
    %v47 = vsel %vm45, %v22, 0
    %vm49 = vcmask 1043456
    %v51 = vsel %vm49, %v44, 0
    %53 = vmatpush.bf16.msra.mxu0 0
    %54 = vmatpush.bf16.msra.mxu0 0
    %55 = vmatpush.bf16.msra.mxu0 0
    %56 = vmatpush.bf16.msra.mxu0 0
    %57 = vmatpush.bf16.msra.mxu0 0
    %58 = vmatpush.bf16.msra.mxu0 0
    %59 = vmatpush.bf16.msra.mxu0 0
    %60 = vmatpush.bf16.msra.mxu0 %v51
    %61 = vmatmul.bf16.gmra.mxu0 %v47
    %v62 = vpop.f32.mrf.mxu0
    %v63 = vadd.f32 0.0, %v62
    %v64 = vpop.f32.mrf.mxu0
    %65 = vdwg.mxu0
    %v66 = vpack.c.bf16 %v63, %v63
    %v68 = vunpack.c.l.b16 %v44
    %v69 = vpack.c.b16 %v68, %v68
    %70 = vrot.lane.b32.xlu0 %v69, 8
    %v71 = vpop.permute.xlu0 %70
    %v74 = vsel %vm45, %v66, %v71
    %v75 = vperm.slane %v42, 0
    %v78 = vunpack.c.l.b16 %v24
    %v79 = vunpack.c.l.b16 %v25
    %v80 = vpack.c.b16 %v79, %v78
    %vm82 = vcmask 130048
    %v83 = vsel %vm82, %v74, 0
    %85 = vmatpush.bf16.msra.mxu0 0
    %86 = vmatpush.bf16.msra.mxu0 0
    %87 = vmatpush.bf16.msra.mxu0 0
    %88 = vmatpush.bf16.msra.mxu0 0
    %89 = vmatpush.bf16.msra.mxu0 0
    %90 = vmatpush.bf16.msra.mxu0 0
    %91 = vmatpush.bf16.msra.mxu0 0
    %92 = vmatpush.bf16.msra.mxu0 %v80
    %93 = vmatmul.bf16.gmra.mxu0 %v83
    %v94 = vpop.f32.mrf.mxu0
    %v95 = vadd.f32 %v75, %v94
    %v96 = vpop.f32.mrf.mxu0
    %97 = vdwg.mxu0
    %v98 = vmul.f32 %v95, %v95
    %vm99 = vcmask 261120
    %v100 = vsel %vm99, %v98, 0.0
    %101 = vadd.xlane.f32.xlu0 %v100
    %v102 = vpop.xlane.xlu0 %101
    %v103 = vmax.f32 %v102, 1e-24
    %v104 = vrsqrt.pop %v103
    %v105 = vmul.f32 %v104, %v103
    %v106 = vmul.f32 %v105, %v104
    %v107 = vmul.f32 0.5, %v106
    %v108 = vsub.f32 1.5, %v107
    %v109 = vmul.f32 %v104, %v108
    %vm110 = vweird.f32 %v103
    %vm111 = vweird.f32 %v104
    %vm112 = vmor %vm110, %vm111
    %v113 = vsel %vm112, %v104, %v109
    %v114 = vmul.f32 %v95, %v113
    %v115 = vtanh.pop %v114
    %v116 = vpack.c.bf16 %v115, %v115
    %v118 = vsel %vm45, %v23, 0
    %v121 = vsel %vm49, %v116, 0
    %123 = vmatpush.bf16.msra.mxu0 0
    %124 = vmatpush.bf16.msra.mxu0 0
    %125 = vmatpush.bf16.msra.mxu0 0
    %126 = vmatpush.bf16.msra.mxu0 0
    %127 = vmatpush.bf16.msra.mxu0 0
    %128 = vmatpush.bf16.msra.mxu0 0
    %129 = vmatpush.bf16.msra.mxu0 0
    %130 = vmatpush.bf16.msra.mxu0 %v121
    %131 = vmatmul.bf16.gmra.mxu0 %v118
    %v132 = vpop.f32.mrf.mxu0
    %v133 = vadd.f32 0.0, %v132
    %v134 = vpop.f32.mrf.mxu0
    %135 = vdwg.mxu0
    %v136 = vpack.c.bf16 %v133, %v133
    %v138 = vunpack.c.l.b16 %v116
    %v139 = vpack.c.b16 %v138, %v138
    %140 = vrot.lane.b32.xlu0 %v139, 32
    %v141 = vpop.permute.xlu0 %140
    %v144 = vsel %vm99, %v136, %v141
    %v145 = vperm.slane %v42, 1
    %v154 = vunpack.c.l.b16 %v26
    %v155 = vunpack.c.l.b16 %v27
    %v156 = vunpack.c.l.b16 %v28
    %v157 = vunpack.c.l.b16 %v29
    %v158 = vunpack.c.l.b16 %v30
    %v159 = vunpack.c.l.b16 %v31
    %v160 = vunpack.c.l.b16 %v32
    %v161 = vunpack.c.l.b16 %v33
    %v162 = vpack.c.b16 %v155, %v154
    %v163 = vpack.c.b16 %v157, %v156
    %v164 = vpack.c.b16 %v159, %v158
    %v165 = vpack.c.b16 %v161, %v160
    %vm170 = vcmask 523264
    %v171 = vsel %vm170, %v144, 0
    %173 = vmatpush.bf16.msra.mxu0 0
    %174 = vmatpush.bf16.msra.mxu0 0
    %175 = vmatpush.bf16.msra.mxu0 0
    %176 = vmatpush.bf16.msra.mxu0 0
    %177 = vmatpush.bf16.msra.mxu0 %v165
    %178 = vmatpush.bf16.msra.mxu0 %v164
    %179 = vmatpush.bf16.msra.mxu0 %v163
    %180 = vmatpush.bf16.msra.mxu0 %v162
    %181 = vmatmul.bf16.gmra.mxu0 %v171
    %v182 = vpop.f32.mrf.mxu0
    %v183 = vadd.f32 %v145, %v182
    %v184 = vpop.f32.mrf.mxu0
    %185 = vdwg.mxu0
    %v186 = vmul.f32 %v183, %v183
    %v187 = vsel %vm99, %v186, 0.0
    %188 = vadd.xlane.f32.xlu0 %v187
    %v189 = vpop.xlane.xlu0 %188
    %v190 = vmax.f32 %v189, 1e-24
    %v191 = vrsqrt.pop %v190
    %v192 = vmul.f32 %v191, %v190
    %v193 = vmul.f32 %v192, %v191
    %v194 = vmul.f32 0.5, %v193
    %v195 = vsub.f32 1.5, %v194
    %v196 = vmul.f32 %v191, %v195
    %vm197 = vweird.f32 %v190
    %vm198 = vweird.f32 %v191
    %vm199 = vmor %vm197, %vm198
    %v200 = vsel %vm199, %v191, %v196
    %v201 = vmul.f32 %v183, %v200
    %v202 = vtanh.pop %v201
    %v203 = vpack.c.bf16 %v202, %v202
    %v205 = vsel %vm49, %v203, 0
    %207 = vmatpush.bf16.msra.mxu0 0
    %208 = vmatpush.bf16.msra.mxu0 0
    %209 = vmatpush.bf16.msra.mxu0 0
    %210 = vmatpush.bf16.msra.mxu0 0
    %211 = vmatpush.bf16.msra.mxu0 0
    %212 = vmatpush.bf16.msra.mxu0 0
    %213 = vmatpush.bf16.msra.mxu0 0
    %214 = vmatpush.bf16.msra.mxu0 %v205
    %215 = vmatmul.bf16.gmra.mxu0 %v47
    %v216 = vpop.f32.mrf.mxu0
    %v217 = vadd.f32 0.0, %v216
    %v218 = vpop.f32.mrf.mxu0
    %219 = vdwg.mxu0
    %v220 = vpack.c.bf16 %v217, %v217
    %v222 = vunpack.c.l.b16 %v203
    %v223 = vpack.c.b16 %v222, %v222
    %224 = vrot.lane.b32.xlu0 %v223, 32
    %v225 = vpop.permute.xlu0 %224
    %v228 = vsel %vm99, %v220, %v225
    %v229 = vperm.slane %v42, 2
    %v238 = vunpack.c.l.b16 %v34
    %v239 = vunpack.c.l.b16 %v35
    %v240 = vunpack.c.l.b16 %v36
    %v241 = vunpack.c.l.b16 %v37
    %v242 = vunpack.c.l.b16 %v38
    %v243 = vunpack.c.l.b16 %v39
    %v244 = vunpack.c.l.b16 %v40
    %v245 = vunpack.c.l.b16 %v41
    %v246 = vpack.c.b16 %v239, %v238
    %v247 = vpack.c.b16 %v241, %v240
    %v248 = vpack.c.b16 %v243, %v242
    %v249 = vpack.c.b16 %v245, %v244
    %v254 = vsel %vm170, %v228, 0
    %256 = vmatpush.bf16.msra.mxu0 0
    %257 = vmatpush.bf16.msra.mxu0 0
    %258 = vmatpush.bf16.msra.mxu0 0
    %259 = vmatpush.bf16.msra.mxu0 0
    %260 = vmatpush.bf16.msra.mxu0 %v249
    %261 = vmatpush.bf16.msra.mxu0 %v248
    %262 = vmatpush.bf16.msra.mxu0 %v247
    %263 = vmatpush.bf16.msra.mxu0 %v246
    %264 = vmatmul.bf16.gmra.mxu0 %v254
    %v265 = vpop.f32.mrf.mxu0
    %v266 = vadd.f32 %v229, %v265
    %v267 = vpop.f32.mrf.mxu0
    %268 = vdwg.mxu0
    %v269 = vmul.f32 %v266, %v266
    %v270 = vsel %vm99, %v269, 0.0
    %271 = vadd.xlane.f32.xlu0 %v270
    %v272 = vpop.xlane.xlu0 %271
    %v273 = vmax.f32 %v272, 1e-24
    %v274 = vrsqrt.pop %v273
    %v275 = vmul.f32 %v274, %v273
    %v276 = vmul.f32 %v275, %v274
    %v277 = vmul.f32 0.5, %v276
    %v278 = vsub.f32 1.5, %v277
    %v279 = vmul.f32 %v274, %v278
    %vm280 = vweird.f32 %v273
    %vm281 = vweird.f32 %v274
    %vm282 = vmor %vm280, %vm281
    %v283 = vsel %vm282, %v274, %v279
    %v284 = vmul.f32 %v266, %v283
    %v285 = vtanh.pop %v284
    %286 = vst.msk [vmem:[#allocation2] sm:$0xff] %vm99, %v285
    // Predicated region
    $region22: #{tpu_custom_call.1} parent=1 // pred_check
      _
    $region23: #{tpu_custom_call.1} parent=1 // pred_check_branch
      %288 = sbr.rel (0) target = $region25
    $region24: #{tpu_custom_call.1} parent=1 // pred_region
      %290 = vsyncadd [#allocation3], 0
      %s292 = sshll.u32 [#allocation2], 4
      %s293 = int_to_ptr.vmem [resolvable:$true] %s292
      %s294 = sshll.u32 %s5, 4
      %s295 = int_to_ptr.hbm [resolvable:$true] %s294
      %297 = dma.vmem_to_hbm [thread:$0]  %s293, 128, %s295, [#allocation3]
    $region25: #{tpu_custom_call.1} parent=1 // pred_fallthru
      _
    // Predicated region
    $region26: #{tpu_custom_call.1} parent=1 // pred_check
      _
    $region27: #{tpu_custom_call.1} parent=1 // pred_check_branch
      %299 = sbr.rel (0) target = $region29
    $region28: #{tpu_custom_call.1} parent=1 // pred_region
      %301 = dma.done [#allocation3], 128
    $region29: #{tpu_custom_call.1} parent=1 // pred_fallthru
      _
    %302 = vsyncpa [#allocation3], 1

</llo_original>
